<compile_context>
chip_gen: v5e
topology: v5e:2x2
jax: 0.10.0
libtpu: 0.0.40
codegen_flags: <defaults>
</compile_context>

<pallas_src>
import jax
import jax.numpy as jnp
from jax.experimental import pallas as pl
from jax.experimental.pallas import tpu as pltpu

_LANE = 128


def _round_up(n, m):
    return ((n + m - 1) // m) * m


def _pick_tile_b(batch):
    """Generation-aware lane-tile size.

    VMEM per step (sublane-padded, double-buffered):
      input  (4, tile_b) f32 -> pads to 8 sublanes -> 32*tile_b B / buffer
      output (1, tile_b) f32 -> pads to 8 sublanes -> 32*tile_b B / buffer
      total ~128*tile_b bytes  (64K -> 8 MiB, 128K -> 16 MiB)
    Caps stay inside the default scoped-VMEM limit per generation
    (v5e 16 MiB, v6e/v7x 32 MiB), so no vmem_limit override is needed.
    """
    try:
        kind = jax.devices()[0].device_kind.lower()
    except Exception:  # pragma: no cover - defensive; fall back to safe cap
        kind = ""
    cap = 64 * 1024 if "v5" in kind else 128 * 1024
    tile = min(cap, _round_up(max(batch, 1), _LANE))
    # v7x megacore: keep >=2 grid steps so dimension_semantics=("parallel",)
    # can shard the batch axis across the two TensorCores.
    if "v7" in kind and batch > 2 * _LANE:
        tile = min(tile, _round_up(pl.cdiv(batch, 2), _LANE))
    return max(_LANE, tile)


def _energy_kernel(w_ref, b_ref, xT_ref, o_ref):
    # w_ref: SMEM (K,) f32 scalars, b_ref: SMEM (1,) f32 scalar.
    # xT_ref: VMEM (K, tile_b) feature-major input tile (batch on lanes).
    # o_ref : VMEM (1, tile_b) lane-dense output row (unmasked vst).
    k_dim = xT_ref.shape[0]  # static (=4): fully unrolled VPU multiply-adds
    acc = xT_ref[0:1, :] * w_ref[0] + b_ref[0]
    for k in range(1, k_dim):
        acc = acc + xT_ref[k:k + 1, :] * w_ref[k]
    o_ref[...] = acc


def _linear41_feature_major(xT, weight, bias):
    """y_row = weight @ xT + bias for feature-major xT of shape (4, B).

    Returns (1, B) float32.  This is the zero-extra-copy entry point: feed it
    directly if the producer can supply activations feature-major.
    """
    K, B = xT.shape
    tile_b = _pick_tile_b(B)
    grid = (pl.cdiv(B, tile_b),)  # ragged last block handled by Pallas:
    # junk tail lanes only feed lane-wise math and are dropped on writeback.

    w_row = weight.reshape(K).astype(jnp.float32)  # (K,) scalars -> SMEM
    b_vec = bias.reshape(1).astype(jnp.float32)    # (1,) scalar  -> SMEM

    return pl.pallas_call(
        _energy_kernel,
        out_shape=jax.ShapeDtypeStruct((1, B), jnp.float32),
        grid=grid,
        in_specs=[
            pl.BlockSpec(memory_space=pltpu.MemorySpace.SMEM),  # weight scalars
            pl.BlockSpec(memory_space=pltpu.MemorySpace.SMEM),  # bias scalar
            pl.BlockSpec((K, tile_b), lambda i: (0, i)),        # x^T lane tile
        ],
        out_specs=pl.BlockSpec((1, tile_b), lambda i: (0, i)),  # lane-dense row
        compiler_params=pltpu.CompilerParams(
            dimension_semantics=("parallel",)),                 # megacore on v7x
        cost_estimate=pl.CostEstimate(
            flops=8 * B, bytes_accessed=20 * B, transcendentals=0),
    )(w_row, b_vec, xT.astype(jnp.float32))


def calculate_energy_forward(x, weight, bias):
    """Equivalent of nn.Linear(4, 1): y = x @ weight.T + bias.

    x:      (B, 4)  float32
    weight: (1, 4)  float32  (PyTorch layout: (out_features, in_features))
    bias:   (1,)    float32
    returns (B, 1)
    """
    B, _ = x.shape
    # The (B, 4) row-major interface forces one transpose pass in HBM before
    # the kernel; XLA cannot fuse it into the pallas custom call.
    # TODO(synk): plumb feature-major (4, B) activations from the producer and
    # call _linear41_feature_major directly to hit the 20 B/row HBM minimum.
    out_row = _linear41_feature_major(x.T, weight, bias)   # (1, B)
    return jnp.reshape(out_row, (B, 1)).astype(x.dtype)    # free bitcast


if __name__ == "__main__":
    key = jax.random.PRNGKey(0)
    k_x, k_w, k_b = jax.random.split(key, 3)

    B, IN, OUT = 8, 4, 1

    # Deterministic parameter init mimicking PyTorch Linear: U(-1/sqrt(in), 1/sqrt(in))
    bound = 1.0 / jnp.sqrt(jnp.float32(IN))
    weight = jax.random.uniform(k_w, (OUT, IN), jnp.float32, -bound, bound)
    bias = jax.random.uniform(k_b, (OUT,), jnp.float32, -bound, bound)

    x = jax.random.normal(k_x, (B, IN), jnp.float32)
    y = jax.block_until_ready(calculate_energy_forward(x, weight, bias))
    y_ref = x @ weight.T + bias
    assert y.shape == (B, OUT)
    assert jnp.allclose(y, y_ref, atol=1e-5, rtol=1e-5)

    # Ragged batch (not a multiple of 128): exercises the no-pad tail path.
    x2 = jax.random.normal(k_x, (300, IN), jnp.float32)
    y2 = jax.block_until_ready(calculate_energy_forward(x2, weight, bias))
    assert y2.shape == (300, OUT)
    assert jnp.allclose(y2, x2 @ weight.T + bias, atol=1e-5, rtol=1e-5)

    print("KERNEL_OK")
</pallas_src>

<mosaic_0001>
module attributes {stable_mosaic.version = 11 : i64} {
  func.func @_energy_kernel(%arg0: i32, %arg1: memref<4xf32, #tpu.memory_space<smem>>, %arg2: memref<1xf32, #tpu.memory_space<smem>>, %arg3: memref<4x128xf32, #tpu.memory_space<vmem>>, %arg4: memref<1x128xf32, #tpu.memory_space<vmem>>) attributes {dimension_semantics = [#tpu.dimension_semantics<parallel>], iteration_bounds = array<i64: 1>, scalar_prefetch = 0 : i64, scratch_operands = 0 : i64, tpu.core_type = #tpu.core_type<tc>, window_params = [{transform_indices = @transform_0, window_bounds = array<i64: 4>}, {transform_indices = @transform_1, window_bounds = array<i64: 1>}, {transform_indices = @transform_2, window_bounds = array<i64: 4, 128>}, {transform_indices = @transform_3, window_bounds = array<i64: 1, 128>}]} {
    %c0 = arith.constant 0 : index
    %c0_0 = arith.constant 0 : index
    %0 = vector.load %arg3[%c0, %c0_0] : memref<4x128xf32, #tpu.memory_space<vmem>>, vector<1x128xf32>
    %c0_1 = arith.constant 0 : index
    %1 = memref.load %arg1[%c0_1] : memref<4xf32, #tpu.memory_space<smem>>
    %2 = vector.broadcast %1 : f32 to vector<1x128xf32>
    %3 = arith.mulf %0, %2 : vector<1x128xf32>
    %c0_2 = arith.constant 0 : index
    %4 = memref.load %arg2[%c0_2] : memref<1xf32, #tpu.memory_space<smem>>
    %5 = vector.broadcast %4 : f32 to vector<1x128xf32>
    %6 = arith.addf %3, %5 : vector<1x128xf32>
    %c1 = arith.constant 1 : index
    %c0_3 = arith.constant 0 : index
    %7 = vector.load %arg3[%c1, %c0_3] : memref<4x128xf32, #tpu.memory_space<vmem>>, vector<1x128xf32>
    %c1_4 = arith.constant 1 : index
    %8 = memref.load %arg1[%c1_4] : memref<4xf32, #tpu.memory_space<smem>>
    %9 = vector.broadcast %8 : f32 to vector<1x128xf32>
    %10 = arith.mulf %7, %9 : vector<1x128xf32>
    %11 = arith.addf %6, %10 : vector<1x128xf32>
    %c2 = arith.constant 2 : index
    %c0_5 = arith.constant 0 : index
    %12 = vector.load %arg3[%c2, %c0_5] : memref<4x128xf32, #tpu.memory_space<vmem>>, vector<1x128xf32>
    %c2_6 = arith.constant 2 : index
    %13 = memref.load %arg1[%c2_6] : memref<4xf32, #tpu.memory_space<smem>>
    %14 = vector.broadcast %13 : f32 to vector<1x128xf32>
    %15 = arith.mulf %12, %14 : vector<1x128xf32>
    %16 = arith.addf %11, %15 : vector<1x128xf32>
    %c3 = arith.constant 3 : index
    %c0_7 = arith.constant 0 : index
    %17 = vector.load %arg3[%c3, %c0_7] : memref<4x128xf32, #tpu.memory_space<vmem>>, vector<1x128xf32>
    %c3_8 = arith.constant 3 : index
    %18 = memref.load %arg1[%c3_8] : memref<4xf32, #tpu.memory_space<smem>>
    %19 = vector.broadcast %18 : f32 to vector<1x128xf32>
    %20 = arith.mulf %17, %19 : vector<1x128xf32>
    %21 = arith.addf %16, %20 : vector<1x128xf32>
    %c0_9 = arith.constant 0 : index
    %c0_10 = arith.constant 0 : index
    %22 = vector.load %arg4[%c0_9, %c0_10] : memref<1x128xf32, #tpu.memory_space<vmem>>, vector<1x128xf32>
    tpu.vector_store %arg4[%c0_9, %c0_10], %21 {strides = array<i32>} : memref<1x128xf32, #tpu.memory_space<vmem>>, vector<1x128xf32>,
    return
  }
  func.func @transform_0(%arg0: i32) -> i32 {
    %c0_i32 = arith.constant 0 : i32
    %c0_i32_0 = arith.constant 0 : i32
    return %c0_i32 : i32
  }
  func.func @transform_1(%arg0: i32) -> i32 {
    %c0_i32 = arith.constant 0 : i32
    %c0_i32_0 = arith.constant 0 : i32
    return %c0_i32 : i32
  }
  func.func @transform_2(%arg0: i32) -> (i32, i32) {
    %c0_i32 = arith.constant 0 : i32
    %c0_i32_0 = arith.constant 0 : i32
    return %c0_i32, %arg0 : i32, i32
  }
  func.func @transform_3(%arg0: i32) -> (i32, i32) {
    %c0_i32 = arith.constant 0 : i32
    %c0_i32_0 = arith.constant 0 : i32
    return %c0_i32, %arg0 : i32, i32
  }
}

</mosaic_0001>

<llo_original>
// kernel: tpu_custom_call.1
$region0: #{tpu_custom_call.1}
  #allocation0 [shape = 'u32[]', space=smem, size = 0x4, offset = 0x4, fixed_abs, tag = 'smem constant byte address 0x4 - core index']
  #allocation1 [shape = 'u32[72,128]{1,0:T(1,128)}', space=vmem, size = 0x9000, scoped, tag = 'internal scratch']
  #allocation2 [shape = 'f32[1]{0:T(128)S(6)}', space=smem, size = 0x200, scoped, tag = 'scoped memory for tpu_custom_call.1']
  %s0 = inlined_call_operand.vmem [shape: f32[4], index: 0, kind: input, shape index: {}]
  %s1 = inlined_call_operand.<no memory space> [shape: f32[1], index: 1, kind: input, shape index: {}]
  %s2 = inlined_call_operand.hbm [shape: f32[4,8], index: 2, kind: input, shape index: {}]
  %s3 = inlined_call_operand.hbm [shape: f32[1,8], index: 3, kind: output, shape index: {}]
  %s4 = sld [smem:[#allocation0]]
  $region30: #{tpu_custom_call.1} parent=0
    _
  %s6 = ssub.s32 1, %s4
  %s7 = scalar_select 0, %s6, %s4
  %8 = sst [smem:[#allocation2]] %s1
  $region1: #{tpu_custom_call.1} parent=0
    #allocation3 [shape = 'u8[512]{0}', space=smem, size = 0x200, scoped, tag = 'input window, operand 0, single buffered']
    #allocation4 [shape = 's32[1]{0}', space=sflag, size = 0x4, scoped, tag = 'scoped memory for tpu_custom_call.1']
    #allocation5 [shape = 's32[1]{0}', space=sflag, size = 0x4, scoped, tag = 'scoped memory for tpu_custom_call.1']
    #allocation6 [shape = 's32[1]{0}', space=sflag, size = 0x4, scoped, tag = 'scoped memory for tpu_custom_call.1']
    #allocation7 [shape = 'u8[2048]{0}', space=vmem, size = 0x800, scoped, tag = 'input window, operand 2, single buffered']
    #allocation8 [shape = 'u8[512]{0}', space=vmem, size = 0x400, scoped, tag = 'output window, operand 0, single buffered']
    %9 = vsyncpa [#allocation6], 0
    %10 = vsyncpa [#allocation4], 0
    %11 = vsyncpa [#allocation5], 0
    // Predicated region
    $region2: #{tpu_custom_call.1} parent=1 // pred_check
      _
    $region3: #{tpu_custom_call.1} parent=1 // pred_check_branch
      %13 = sbr.rel (0) target = $region5
    $region4: #{tpu_custom_call.1} parent=1 // pred_region
      %15 = vsyncadd [#allocation6], 0
      %s17 = sshll.u32 %s0, 4
      %s18 = int_to_ptr.vmem [resolvable:$true] %s17
      %20 = dma.vmem_to_smem %s18, 16, [#allocation3], [#allocation6]
    $region5: #{tpu_custom_call.1} parent=1 // pred_fallthru
      _
    // Predicated region
    $region6: #{tpu_custom_call.1} parent=1 // pred_check
      _
    $region7: #{tpu_custom_call.1} parent=1 // pred_check_branch
      %22 = sbr.rel (0) target = $region9
    $region8: #{tpu_custom_call.1} parent=1 // pred_region
      _
    $region9: #{tpu_custom_call.1} parent=1 // pred_fallthru
      _
    // Predicated region
    $region10: #{tpu_custom_call.1} parent=1 // pred_check
      _
    $region11: #{tpu_custom_call.1} parent=1 // pred_check_branch
      %24 = sbr.rel (0) target = $region13
    $region12: #{tpu_custom_call.1} parent=1 // pred_region
      %26 = vsyncadd [#allocation4], 0
      %s28 = sshll.u32 %s2, 4
      %s29 = int_to_ptr.hbm [resolvable:$true] %s28
      %s30 = sshll.u32 [#allocation7], 4
      %s31 = int_to_ptr.vmem [resolvable:$true] %s30
      %33 = dma.hbm_to_vmem [thread:$0]  %s29, 64, %s31, [#allocation4]
    $region13: #{tpu_custom_call.1} parent=1 // pred_fallthru
      _
    // Predicated region
    $region14: #{tpu_custom_call.1} parent=1 // pred_check
      _
    $region15: #{tpu_custom_call.1} parent=1 // pred_check_branch
      %35 = sbr.rel (0) target = $region17
    $region16: #{tpu_custom_call.1} parent=1 // pred_region
      %37 = dma.done [#allocation6], 16
    $region17: #{tpu_custom_call.1} parent=1 // pred_fallthru
      _
    // Predicated region
    $region18: #{tpu_custom_call.1} parent=1 // pred_check
      _
    $region19: #{tpu_custom_call.1} parent=1 // pred_check_branch
      %39 = sbr.rel (0) target = $region21
    $region20: #{tpu_custom_call.1} parent=1 // pred_region
      %41 = dma.done [#allocation4], 64
    $region21: #{tpu_custom_call.1} parent=1 // pred_fallthru
      _
    %42 = sfence
    %v43 = vld [vmem:[#allocation7] sm:$0x1]
    %s44 = sld [smem:[#allocation3]]
    %v45 = vstv %s44
    %v46 = vmul.f32 %v43, %v45
    %s47 = sld [smem:[#allocation2]]
    %v48 = vstv %s47
    %v49 = vadd.f32 %v46, %v48
    %v50 = vld [vmem:[#allocation7 + $0x1] sm:$0x1]
    %s51 = sld [smem:[#allocation3 + $0x1]]
    %v52 = vstv %s51
    %v53 = vmul.f32 %v50, %v52
    %v54 = vadd.f32 %v49, %v53
    %v55 = vld [vmem:[#allocation7 + $0x2] sm:$0x1]
    %s56 = sld [smem:[#allocation3 + $0x2]]
    %v57 = vstv %s56
    %v58 = vmul.f32 %v55, %v57
    %v59 = vadd.f32 %v54, %v58
    %v60 = vld [vmem:[#allocation7 + $0x3] sm:$0x1]
    %s61 = sld [smem:[#allocation3 + $0x3]]
    %v62 = vstv %s61
    %v63 = vmul.f32 %v60, %v62
    %v64 = vadd.f32 %v59, %v63
    %65 = vst [vmem:[#allocation8] sm:$0x1] %v64
    // Predicated region
    $region22: #{tpu_custom_call.1} parent=1 // pred_check
      _
    $region23: #{tpu_custom_call.1} parent=1 // pred_check_branch
      %67 = sbr.rel (0) target = $region25
    $region24: #{tpu_custom_call.1} parent=1 // pred_region
      %69 = vsyncadd [#allocation5], 0
      %s71 = sshll.u32 [#allocation8], 4
      %s72 = int_to_ptr.vmem [resolvable:$true] %s71
      %s73 = sshll.u32 %s3, 4
      %s74 = int_to_ptr.hbm [resolvable:$true] %s73
      %76 = dma.vmem_to_hbm [thread:$0]  %s72, 16, %s74, [#allocation5]
    $region25: #{tpu_custom_call.1} parent=1 // pred_fallthru
      _
    // Predicated region
    $region26: #{tpu_custom_call.1} parent=1 // pred_check
      _
    $region27: #{tpu_custom_call.1} parent=1 // pred_check_branch
      %78 = sbr.rel (0) target = $region29
    $region28: #{tpu_custom_call.1} parent=1 // pred_region
      %80 = dma.done [#allocation5], 16
    $region29: #{tpu_custom_call.1} parent=1 // pred_fallthru
      _
    %81 = vsyncpa [#allocation4], 1
    %82 = vsyncpa [#allocation5], 1
    %83 = vsyncpa [#allocation6], 1

</llo_original>
